<compile_context>
chip_gen: v7x
topology: tpu7x:2x2x1
jax: 0.10.0
libtpu: 0.0.40
codegen_flags: <defaults>
</compile_context>

<pallas_src>
import functools

import jax
import jax.numpy as jnp
from jax.experimental import pallas as pl
from jax.experimental.pallas import tpu as pltpu


def _round_up(x, m):
    return ((x + m - 1) // m) * m


def simple_head_kernel(x_ref, w1_ref, b1_ref, w2_ref, b2_ref, o_ref):
    # Hoisted single reads of the biases (kept f32; broadcast happens once per tile).
    b1 = b1_ref[...]                      # (1, H)    f32
    b2 = b2_ref[...]                      # (1, Cpad) f32

    # fc1: bf16 operands on the MXU, f32 accumulation.
    h = jnp.dot(x_ref[...].astype(jnp.bfloat16),
                w1_ref[...].astype(jnp.bfloat16),
                preferred_element_type=jnp.float32)
    # f32 epilogue (bias + ReLU) — keeps the VALU path clean on v5e (no bf16 VPU).
    h = jnp.maximum(h + b1, 0.0)

    # TODO(synk): Dropout(p=0.5) is identity in eval mode; training-mode stochastic
    # masking (pltpu.prng_seed + pltpu.prng_random_bits + 1/(1-p) rescale) is not
    # implemented here.

    # fc2: bf16 operands, f32 accumulation, f32 bias add, cast at the final store.
    o = jnp.dot(h.astype(jnp.bfloat16),
                w2_ref[...].astype(jnp.bfloat16),
                preferred_element_type=jnp.float32)
    o_ref[...] = (o + b2).astype(o_ref.dtype)


@functools.partial(jax.jit, static_argnames=("tile_b",))
def simple_head_forward(x, w1, b1, w2, b2, *, tile_b=512):
    """x: (B, in_dim) f32; w1: (in_dim, H); b1: (H,) or (1, H); w2: (H, C); b2: (C,) or (1, C)."""
    B, in_dim = x.shape
    H, C = w2.shape
    b1 = b1.reshape(1, H)
    b2 = b2.reshape(1, C)

    # --- Lane-dense output: pad W2 / b2 columns to a multiple of 128 -------------
    C_pad = _round_up(C, 128)
    if C_pad != C:
        w2_p = jnp.zeros((H, C_pad), w2.dtype).at[:, :C].set(w2)
        b2_p = jnp.zeros((1, C_pad), b2.dtype).at[:, :C].set(b2)
    else:
        w2_p, b2_p = w2, b2

    # --- Batch tiling: multiple of 8 sublanes, up to `tile_b` rows per grid step ---
    TILE_B = min(tile_b, _round_up(max(B, 8), 8))
    B_pad = _round_up(B, TILE_B)
    if B_pad != B:
        x_p = jnp.zeros((B_pad, in_dim), x.dtype).at[:B, :].set(x)
    else:
        x_p = x
    grid = (B_pad // TILE_B,)

    # --- VMEM budget (double-buffered tiles + resident weights + temporaries) ----
    vmem_bytes = (
        2 * TILE_B * in_dim * 4            # x tile, double-buffered
        + 2 * TILE_B * C_pad * 4           # out tile, double-buffered
        + 2 * (in_dim * H + H + H * C_pad + C_pad) * 4   # weights + biases
        + 3 * TILE_B * H * 4               # h + bf16 temporaries, slack
    )
    vmem_limit = min(int(2 * vmem_bytes) + (4 << 20), 100 << 20)

    cost = pl.CostEstimate(
        flops=2 * B_pad * (in_dim * H + H * C_pad),
        transcendentals=0,
        bytes_accessed=(x_p.size + w1.size + b1.size + w2_p.size + b2_p.size
                        + B_pad * C_pad) * 4,
    )

    out = pl.pallas_call(
        simple_head_kernel,
        out_shape=jax.ShapeDtypeStruct((B_pad, C_pad), x.dtype),
        grid=grid,
        in_specs=[
            pl.BlockSpec((TILE_B, in_dim), lambda i: (i, 0)),   # batch-tiled
            pl.BlockSpec((in_dim, H),      lambda i: (0, 0)),   # VMEM-resident
            pl.BlockSpec((1, H),           lambda i: (0, 0)),   # VMEM-resident
            pl.BlockSpec((H, C_pad),       lambda i: (0, 0)),   # VMEM-resident
            pl.BlockSpec((1, C_pad),       lambda i: (0, 0)),   # VMEM-resident
        ],
        out_specs=pl.BlockSpec((TILE_B, C_pad), lambda i: (i, 0)),
        compiler_params=pltpu.CompilerParams(
            dimension_semantics=("parallel",),      # megacore-shardable on v7x
            vmem_limit_bytes=vmem_limit,
        ),
        cost_estimate=cost,
    )(x_p, w1, b1, w2_p, b2_p)

    return out[:B, :C]


def init_params(key, in_dim, hidden, num_classes, dtype=jnp.float32):
    """Deterministic init mimicking nn.Linear's uniform(-1/sqrt(fan_in), 1/sqrt(fan_in))."""
    k1, k2, k3, k4 = jax.random.split(key, 4)
    lim1 = 1.0 / jnp.sqrt(in_dim)
    lim2 = 1.0 / jnp.sqrt(hidden)
    # PyTorch Linear weight is (out, in); we store the transpose (in, out).
    w1 = jax.random.uniform(k1, (in_dim, hidden), dtype, minval=-lim1, maxval=lim1)
    b1 = jax.random.uniform(k2, (1, hidden), dtype, minval=-lim1, maxval=lim1)
    w2 = jax.random.uniform(k3, (hidden, num_classes), dtype, minval=-lim2, maxval=lim2)
    b2 = jax.random.uniform(k4, (1, num_classes), dtype, minval=-lim2, maxval=lim2)
    return w1, b1, w2, b2


if __name__ == "__main__":
    # Small shapes consistent with SimpleHead (hidden defaults to 256, 2 classes).
    B, IN_DIM, HIDDEN, NUM_CLASSES = 16, 64, 256, 2

    key = jax.random.PRNGKey(0)
    kx, kp = jax.random.split(key)
    x = jax.random.normal(kx, (B, IN_DIM), jnp.float32)
    w1, b1, w2, b2 = init_params(kp, IN_DIM, HIDDEN, NUM_CLASSES)

    out = simple_head_forward(x, w1, b1, w2, b2)
    out = jax.block_until_ready(out)
    assert out.shape == (B, NUM_CLASSES)

    # Reference that mirrors the kernel's bf16-operand / f32-accumulate math
    # (eval-mode dropout = identity).
    h_ref = jnp.dot(x.astype(jnp.bfloat16), w1.astype(jnp.bfloat16),
                    preferred_element_type=jnp.float32) + b1
    h_ref = jnp.maximum(h_ref, 0.0)
    ref = jnp.dot(h_ref.astype(jnp.bfloat16), w2.astype(jnp.bfloat16),
                  preferred_element_type=jnp.float32) + b2
    assert jnp.allclose(out, ref, atol=1e-3, rtol=1e-3), \
        f"max abs err = {jnp.max(jnp.abs(out - ref))}"

    # Sanity vs full-f32 math (looser tolerance for bf16 operand rounding).
    ref_f32 = jnp.maximum(x @ w1 + b1, 0.0) @ w2 + b2
    assert jnp.allclose(out, ref_f32, atol=5e-2, rtol=5e-2)

    print("KERNEL_OK")
</pallas_src>

<mosaic_0001>
module attributes {stable_mosaic.version = 11 : i64} {
  func.func @simple_head_kernel(%arg0: i32, %arg1: memref<16x64xf32, #tpu.memory_space<vmem>>, %arg2: memref<64x256xf32, #tpu.memory_space<vmem>>, %arg3: memref<1x256xf32, #tpu.memory_space<vmem>>, %arg4: memref<256x128xf32, #tpu.memory_space<vmem>>, %arg5: memref<1x128xf32, #tpu.memory_space<vmem>>, %arg6: memref<16x128xf32, #tpu.memory_space<vmem>>) attributes {dimension_semantics = [#tpu.dimension_semantics<parallel>], iteration_bounds = array<i64: 1>, scalar_prefetch = 0 : i64, scratch_operands = 0 : i64, tpu.core_type = #tpu.core_type<tc>, window_params = [{transform_indices = @transform_0, window_bounds = array<i64: 16, 64>}, {pipeline_mode = #tpu.pipeline_mode<synchronous>, transform_indices = @transform_1, window_bounds = array<i64: 64, 256>}, {pipeline_mode = #tpu.pipeline_mode<synchronous>, transform_indices = @transform_2, window_bounds = array<i64: 1, 256>}, {pipeline_mode = #tpu.pipeline_mode<synchronous>, transform_indices = @transform_3, window_bounds = array<i64: 256, 128>}, {pipeline_mode = #tpu.pipeline_mode<synchronous>, transform_indices = @transform_4, window_bounds = array<i64: 1, 128>}, {transform_indices = @transform_5, window_bounds = array<i64: 16, 128>}]} {
    %c0 = arith.constant 0 : index
    %c0_0 = arith.constant 0 : index
    %0 = vector.load %arg3[%c0, %c0_0] : memref<1x256xf32, #tpu.memory_space<vmem>>, vector<1x256xf32>
    %c0_1 = arith.constant 0 : index
    %c0_2 = arith.constant 0 : index
    %1 = vector.load %arg5[%c0_1, %c0_2] : memref<1x128xf32, #tpu.memory_space<vmem>>, vector<1x128xf32>
    %c0_3 = arith.constant 0 : index
    %c0_4 = arith.constant 0 : index
    %2 = vector.load %arg1[%c0_3, %c0_4] : memref<16x64xf32, #tpu.memory_space<vmem>>, vector<16x64xf32>
    %3 = arith.truncf %2 : vector<16x64xf32> to vector<16x64xbf16>
    %c0_5 = arith.constant 0 : index
    %c0_6 = arith.constant 0 : index
    %4 = vector.load %arg2[%c0_5, %c0_6] : memref<64x256xf32, #tpu.memory_space<vmem>>, vector<64x256xf32>
    %5 = arith.truncf %4 : vector<64x256xf32> to vector<64x256xbf16>
    %cst = arith.constant dense<0.000000e+00> : vector<16x256xf32>
    %6 = tpu.matmul %3, %5, %cst {dimension_numbers = #tpu.dot_dimension_numbers<[1], [0], [0], [1], [0, 0, 1, 1], [], []>} : vector<16x64xbf16>, vector<64x256xbf16>, vector<16x256xf32> -> vector<16x256xf32>
    %7 = vector.broadcast %0 : vector<1x256xf32> to vector<16x256xf32>
    %8 = arith.addf %6, %7 : vector<16x256xf32>
    %cst_7 = arith.constant 0.000000e+00 : f32
    %9 = vector.broadcast %cst_7 : f32 to vector<16x256xf32>
    %10 = arith.maximumf %8, %9 : vector<16x256xf32>
    %11 = arith.truncf %10 : vector<16x256xf32> to vector<16x256xbf16>
    %c0_8 = arith.constant 0 : index
    %c0_9 = arith.constant 0 : index
    %12 = vector.load %arg4[%c0_8, %c0_9] : memref<256x128xf32, #tpu.memory_space<vmem>>, vector<256x128xf32>
    %13 = arith.truncf %12 : vector<256x128xf32> to vector<256x128xbf16>
    %cst_10 = arith.constant dense<0.000000e+00> : vector<16x128xf32>
    %14 = tpu.matmul %11, %13, %cst_10 {dimension_numbers = #tpu.dot_dimension_numbers<[1], [0], [0], [1], [0, 0, 1, 1], [], []>} : vector<16x256xbf16>, vector<256x128xbf16>, vector<16x128xf32> -> vector<16x128xf32>
    %15 = vector.broadcast %1 : vector<1x128xf32> to vector<16x128xf32>
    %16 = arith.addf %14, %15 : vector<16x128xf32>
    %c0_11 = arith.constant 0 : index
    %c0_12 = arith.constant 0 : index
    %17 = vector.load %arg6[%c0_11, %c0_12] : memref<16x128xf32, #tpu.memory_space<vmem>>, vector<16x128xf32>
    tpu.vector_store %arg6[%c0_11, %c0_12], %16 {strides = array<i32>} : memref<16x128xf32, #tpu.memory_space<vmem>>, vector<16x128xf32>,
    return
  }
  func.func @transform_0(%arg0: i32) -> (i32, i32) {
    %c0_i32 = arith.constant 0 : i32
    %c0_i32_0 = arith.constant 0 : i32
    return %arg0, %c0_i32 : i32, i32
  }
  func.func @transform_1(%arg0: i32) -> (i32, i32) {
    %c0_i32 = arith.constant 0 : i32
    %c0_i32_0 = arith.constant 0 : i32
    %c0_i32_1 = arith.constant 0 : i32
    return %c0_i32, %c0_i32_0 : i32, i32
  }
  func.func @transform_2(%arg0: i32) -> (i32, i32) {
    %c0_i32 = arith.constant 0 : i32
    %c0_i32_0 = arith.constant 0 : i32
    %c0_i32_1 = arith.constant 0 : i32
    return %c0_i32, %c0_i32_0 : i32, i32
  }
  func.func @transform_3(%arg0: i32) -> (i32, i32) {
    %c0_i32 = arith.constant 0 : i32
    %c0_i32_0 = arith.constant 0 : i32
    %c0_i32_1 = arith.constant 0 : i32
    return %c0_i32, %c0_i32_0 : i32, i32
  }
  func.func @transform_4(%arg0: i32) -> (i32, i32) {
    %c0_i32 = arith.constant 0 : i32
    %c0_i32_0 = arith.constant 0 : i32
    %c0_i32_1 = arith.constant 0 : i32
    return %c0_i32, %c0_i32_0 : i32, i32
  }
  func.func @transform_5(%arg0: i32) -> (i32, i32) {
    %c0_i32 = arith.constant 0 : i32
    %c0_i32_0 = arith.constant 0 : i32
    return %arg0, %c0_i32 : i32, i32
  }
}

</mosaic_0001>

<llo_original>
// kernel: simple_head_forward.1
$region0: #{simple_head_forward.1}
  #allocation0 [shape = 'u32[]', space=smem, size = 0x4, offset = 0x4, fixed_abs, tag = 'smem constant byte address 0x4 - core index']
  #allocation1 [shape = 'u32[144,128]{1,0:T(1,128)}', space=vmem, size = 0x12000, scoped, tag = 'internal scratch']
  %s0 = inlined_call_operand.vmem [shape: f32[16,64], index: 0, kind: input, shape index: {}]
  %s1 = inlined_call_operand.vmem [shape: f32[64,256], index: 1, kind: input, shape index: {}]
  %s2 = inlined_call_operand.vmem [shape: f32[1,256], index: 2, kind: input, shape index: {}]
  %s3 = inlined_call_operand.vmem [shape: f32[256,128], index: 3, kind: input, shape index: {}]
  %s4 = inlined_call_operand.vmem [shape: f32[1,128], index: 4, kind: input, shape index: {}]
  %s5 = inlined_call_operand.vmem [shape: f32[16,128], index: 5, kind: output, shape index: {}]
  %s6 = sld [smem:[#allocation0]]
  $region30: #{simple_head_forward.1} parent=0
    _
  %s8 = ssub.s32 1, %s6
  %s9 = scalar_select 0, %s8, %s6
  // Predicated region
  $region2: #{simple_head_forward.1} parent=0 // pred_check
    _
  $region3: #{simple_head_forward.1} parent=0 // pred_check_branch
    %11 = sbr.rel (0) target = $region5
  $region4: #{simple_head_forward.1} parent=0 // pred_region
    _
  $region5: #{simple_head_forward.1} parent=0 // pred_fallthru
    _
  // Predicated region
  $region6: #{simple_head_forward.1} parent=0 // pred_check
    _
  $region7: #{simple_head_forward.1} parent=0 // pred_check_branch
    %13 = sbr.rel (0) target = $region9
  $region8: #{simple_head_forward.1} parent=0 // pred_region
    _
  $region9: #{simple_head_forward.1} parent=0 // pred_fallthru
    _
  // Predicated region
  $region10: #{simple_head_forward.1} parent=0 // pred_check
    _
  $region11: #{simple_head_forward.1} parent=0 // pred_check_branch
    %15 = sbr.rel (0) target = $region13
  $region12: #{simple_head_forward.1} parent=0 // pred_region
    _
  $region13: #{simple_head_forward.1} parent=0 // pred_fallthru
    _
  // Predicated region
  $region14: #{simple_head_forward.1} parent=0 // pred_check
    _
  $region15: #{simple_head_forward.1} parent=0 // pred_check_branch
    %17 = sbr.rel (0) target = $region17
  $region16: #{simple_head_forward.1} parent=0 // pred_region
    _
  $region17: #{simple_head_forward.1} parent=0 // pred_fallthru
    _
  // Predicated region
  $region18: #{simple_head_forward.1} parent=0 // pred_check
    _
  $region19: #{simple_head_forward.1} parent=0 // pred_check_branch
    %19 = sbr.rel (0) target = $region21
  $region20: #{simple_head_forward.1} parent=0 // pred_region
    _
  $region21: #{simple_head_forward.1} parent=0 // pred_fallthru
    _
  %v21 = vld [vmem:[%s2] sm:$0x3]
  %v22 = vld [vmem:[%s4] sm:$0x1]
  %v23 = vld [vmem:[%s0] sm:$0xff]
  %v24 = vld [vmem:[%s0 + $0x8] sm:$0xff]
  %v25 = vpack.c.bf16 %v24, %v23
  %v26 = vld [vmem:[%s1] sm:$0xff]
  %v27 = vld [vmem:[%s1 + $0x8] sm:$0xff]
  %v28 = vld [vmem:[%s1 + $0x10] sm:$0xff]
  %v29 = vld [vmem:[%s1 + $0x18] sm:$0xff]
  %v30 = vld [vmem:[%s1 + $0x20] sm:$0xff]
  %v31 = vld [vmem:[%s1 + $0x28] sm:$0xff]
  %v32 = vld [vmem:[%s1 + $0x30] sm:$0xff]
  %v33 = vld [vmem:[%s1 + $0x38] sm:$0xff]
  %v34 = vld [vmem:[%s1 + $0x40] sm:$0xff]
  %v35 = vld [vmem:[%s1 + $0x48] sm:$0xff]
  %v36 = vld [vmem:[%s1 + $0x50] sm:$0xff]
  %v37 = vld [vmem:[%s1 + $0x58] sm:$0xff]
  %v38 = vld [vmem:[%s1 + $0x60] sm:$0xff]
  %v39 = vld [vmem:[%s1 + $0x68] sm:$0xff]
  %v40 = vld [vmem:[%s1 + $0x70] sm:$0xff]
  %v41 = vld [vmem:[%s1 + $0x78] sm:$0xff]
  %v42 = vpack.c.bf16 %v28, %v26
  %v43 = vpack.c.bf16 %v29, %v27
  %v44 = vpack.c.bf16 %v32, %v30
  %v45 = vpack.c.bf16 %v33, %v31
  %v46 = vpack.c.bf16 %v36, %v34
  %v47 = vpack.c.bf16 %v37, %v35
  %v48 = vpack.c.bf16 %v40, %v38
  %v49 = vpack.c.bf16 %v41, %v39
  %v51 = vlaneseq
  %v52 = vshrl.u32 %v51, 7
  %v53 = vsub.s32 0, %v52
  %v54 = vrot.slane %v21, %v53
  %v55 = vlaneseq
  %v56 = vshrl.u32 %v55, 7
  %v57 = vsub.s32 1, %v56
  %v58 = vrot.slane %v21, %v57
  %vm61 = vcmask 523264
  %v63 = vsel %vm61, %v25, 0
  %65 = vmatprep.subr.bf16.mxu0 %v43
  %66 = vmatpush1.bf16.msra.mxu0 %v42
  %67 = vmatprep.subr.bf16.mxu0 %v45
  %68 = vmatpush1.bf16.msra.mxu0 %v44
  %69 = vmatprep.subr.bf16.mxu0 %v47
  %70 = vmatpush1.bf16.msra.mxu0 %v46
  %71 = vmatprep.subr.bf16.mxu0 %v49
  %72 = vmatpush1.bf16.msra.mxu0 %v48
  %73 = vmatprep.subr.bf16.mxu0 0
  %74 = vmatpush1.bf16.msra.mxu0 0
  %75 = vmatprep.subr.bf16.mxu0 0
  %76 = vmatpush1.bf16.msra.mxu0 0
  %77 = vmatprep.subr.bf16.mxu0 0
  %78 = vmatpush1.bf16.msra.mxu0 0
  %79 = vmatprep.subr.bf16.mxu0 0
  %80 = vmatpush1.bf16.msra.mxu0 0
  %81 = vmatprep.subr.bf16.mxu0 0
  %82 = vmatpush1.bf16.msra.mxu0 0
  %83 = vmatprep.subr.bf16.mxu0 0
  %84 = vmatpush1.bf16.msra.mxu0 0
  %85 = vmatprep.subr.bf16.mxu0 0
  %86 = vmatpush1.bf16.msra.mxu0 0
  %87 = vmatprep.subr.bf16.mxu0 0
  %88 = vmatpush1.bf16.msra.mxu0 0
  %89 = vmatprep.subr.bf16.mxu0 0
  %90 = vmatpush1.bf16.msra.mxu0 0
  %91 = vmatprep.subr.bf16.mxu0 0
  %92 = vmatpush1.bf16.msra.mxu0 0
  %93 = vmatprep.subr.bf16.mxu0 0
  %94 = vmatpush1.bf16.msra.mxu0 0
  %95 = vmatprep.subr.bf16.mxu0 0
  %96 = vmatpush1.bf16.msra.mxu0 0
  %97 = vmatprep.mubr.bf16.mxu0 0
  %98 = vmatmul.mubr.bf16.gmra.mrb[0].mxu0 %v63
  %v99 = vpop.f32.mrb[0].mxu0
  %v100 = vadd.f32 %v54, %v99
  %v101 = vpop.f32.mrb[0].mxu0
  %v102 = vadd.f32 %v58, %v101
  %v103 = vpop.f32.mrb[0].mxu0
  %v104 = vadd.f32 %v54, %v103
  %v105 = vpop.f32.mrb[0].mxu0
  %v106 = vadd.f32 %v58, %v105
  %107 = vdwg.mxu0
  %v108 = vmax.f32 %v100, 0.0
  %v109 = vmax.f32 %v102, 0.0
  %v110 = vmax.f32 %v104, 0.0
  %v111 = vmax.f32 %v106, 0.0
  %v112 = vpack.c.bf16 %v110, %v108
  %v113 = vpack.c.bf16 %v111, %v109
  %v114 = vld [vmem:[%s3] sm:$0xff]
  %v115 = vld [vmem:[%s3 + $0x8] sm:$0xff]
  %v116 = vld [vmem:[%s3 + $0x10] sm:$0xff]
  %v117 = vld [vmem:[%s3 + $0x18] sm:$0xff]
  %v118 = vld [vmem:[%s3 + $0x20] sm:$0xff]
  %v119 = vld [vmem:[%s3 + $0x28] sm:$0xff]
  %v120 = vld [vmem:[%s3 + $0x30] sm:$0xff]
  %v121 = vld [vmem:[%s3 + $0x38] sm:$0xff]
  %v122 = vld [vmem:[%s3 + $0x40] sm:$0xff]
  %v123 = vld [vmem:[%s3 + $0x48] sm:$0xff]
  %v124 = vld [vmem:[%s3 + $0x50] sm:$0xff]
  %v125 = vld [vmem:[%s3 + $0x58] sm:$0xff]
  %v126 = vld [vmem:[%s3 + $0x60] sm:$0xff]
  %v127 = vld [vmem:[%s3 + $0x68] sm:$0xff]
  %v128 = vld [vmem:[%s3 + $0x70] sm:$0xff]
  %v129 = vld [vmem:[%s3 + $0x78] sm:$0xff]
  %v130 = vld [vmem:[%s3 + $0x80] sm:$0xff]
  %v131 = vld [vmem:[%s3 + $0x88] sm:$0xff]
  %v132 = vld [vmem:[%s3 + $0x90] sm:$0xff]
  %v133 = vld [vmem:[%s3 + $0x98] sm:$0xff]
  %v134 = vld [vmem:[%s3 + $0xa0] sm:$0xff]
  %v135 = vld [vmem:[%s3 + $0xa8] sm:$0xff]
  %v136 = vld [vmem:[%s3 + $0xb0] sm:$0xff]
  %v137 = vld [vmem:[%s3 + $0xb8] sm:$0xff]
  %v138 = vld [vmem:[%s3 + $0xc0] sm:$0xff]
  %v139 = vld [vmem:[%s3 + $0xc8] sm:$0xff]
  %v140 = vld [vmem:[%s3 + $0xd0] sm:$0xff]
  %v141 = vld [vmem:[%s3 + $0xd8] sm:$0xff]
  %v142 = vld [vmem:[%s3 + $0xe0] sm:$0xff]
  %v143 = vld [vmem:[%s3 + $0xe8] sm:$0xff]
  %v144 = vld [vmem:[%s3 + $0xf0] sm:$0xff]
  %v145 = vld [vmem:[%s3 + $0xf8] sm:$0xff]
  %v146 = vpack.c.bf16 %v115, %v114
  %v147 = vpack.c.bf16 %v117, %v116
  %v148 = vpack.c.bf16 %v119, %v118
  %v149 = vpack.c.bf16 %v121, %v120
  %v150 = vpack.c.bf16 %v123, %v122
  %v151 = vpack.c.bf16 %v125, %v124
  %v152 = vpack.c.bf16 %v127, %v126
  %v153 = vpack.c.bf16 %v129, %v128
  %v154 = vpack.c.bf16 %v131, %v130
  %v155 = vpack.c.bf16 %v133, %v132
  %v156 = vpack.c.bf16 %v135, %v134
  %v157 = vpack.c.bf16 %v137, %v136
  %v158 = vpack.c.bf16 %v139, %v138
  %v159 = vpack.c.bf16 %v141, %v140
  %v160 = vpack.c.bf16 %v143, %v142
  %v161 = vpack.c.bf16 %v145, %v144
  %v163 = vlaneseq
  %v164 = vshrl.u32 %v163, 7
  %v165 = vsub.s32 0, %v164
  %v166 = vrot.slane %v22, %v165
  %168 = vmatprep.subr.bf16.mxu0 0
  %169 = vmatpush1.bf16.msra.mxu0 %v146
  %170 = vmatprep.subr.bf16.mxu0 0
  %171 = vmatpush1.bf16.msra.mxu0 %v147
  %172 = vmatprep.subr.bf16.mxu0 0
  %173 = vmatpush1.bf16.msra.mxu0 %v148
  %174 = vmatprep.subr.bf16.mxu0 0
  %175 = vmatpush1.bf16.msra.mxu0 %v149
  %176 = vmatprep.subr.bf16.mxu0 0
  %177 = vmatpush1.bf16.msra.mxu0 %v150
  %178 = vmatprep.subr.bf16.mxu0 0
  %179 = vmatpush1.bf16.msra.mxu0 %v151
  %180 = vmatprep.subr.bf16.mxu0 0
  %181 = vmatpush1.bf16.msra.mxu0 %v152
  %182 = vmatprep.subr.bf16.mxu0 0
  %183 = vmatpush1.bf16.msra.mxu0 %v153
  %184 = vmatprep.subr.bf16.mxu0 0
  %185 = vmatpush1.bf16.msra.mxu0 %v154
  %186 = vmatprep.subr.bf16.mxu0 0
  %187 = vmatpush1.bf16.msra.mxu0 %v155
  %188 = vmatprep.subr.bf16.mxu0 0
  %189 = vmatpush1.bf16.msra.mxu0 %v156
  %190 = vmatprep.subr.bf16.mxu0 0
  %191 = vmatpush1.bf16.msra.mxu0 %v157
  %192 = vmatprep.subr.bf16.mxu0 0
  %193 = vmatpush1.bf16.msra.mxu0 %v158
  %194 = vmatprep.subr.bf16.mxu0 0
  %195 = vmatpush1.bf16.msra.mxu0 %v159
  %196 = vmatprep.subr.bf16.mxu0 0
  %197 = vmatpush1.bf16.msra.mxu0 %v160
  %198 = vmatprep.subr.bf16.mxu0 0
  %199 = vmatpush1.bf16.msra.mxu0 %v161
  %200 = vmatprep.mubr.bf16.mxu0 %v113
  %201 = vmatmul.mubr.bf16.gmra.mrb[0].mxu0 %v112
  %v202 = vpop.f32.mrb[0].mxu0
  %v203 = vadd.f32 %v166, %v202
  %v204 = vpop.f32.mrb[0].mxu0
  %v205 = vpop.f32.mrb[0].mxu0
  %v206 = vadd.f32 %v166, %v205
  %v207 = vpop.f32.mrb[0].mxu0
  %208 = vdwg.mxu0
  %209 = vst [vmem:[%s5] sm:$0xff] %v203
  %210 = vst [vmem:[%s5 + $0x8] sm:$0xff] %v206
  // Predicated region
  $region22: #{simple_head_forward.1} parent=0 // pred_check
    _
  $region23: #{simple_head_forward.1} parent=0 // pred_check_branch
    %212 = sbr.rel (0) target = $region25
  $region24: #{simple_head_forward.1} parent=0 // pred_region
    _
  $region25: #{simple_head_forward.1} parent=0 // pred_fallthru
    _
  // Predicated region
  $region26: #{simple_head_forward.1} parent=0 // pred_check
    _
  $region27: #{simple_head_forward.1} parent=0 // pred_check_branch
    %214 = sbr.rel (0) target = $region29
  $region28: #{simple_head_forward.1} parent=0 // pred_region
    _
  $region29: #{simple_head_forward.1} parent=0 // pred_fallthru
    _

</llo_original>
